<compile_context>
chip_gen: v7x
topology: tpu7x:2x2x1
jax: 0.10.0
libtpu: 0.0.40
codegen_flags: <defaults>
</compile_context>

<pallas_src>
import functools

import jax
import jax.numpy as jnp
from jax import lax
from jax.experimental import pallas as pl
from jax.experimental.pallas import tpu as pltpu

_LANES = 128


def _round_up(x, m):
    return (x + m - 1) // m * m


def _physical_vmem_bytes():
    try:
        info = pltpu.get_tpu_info()
        cap = int(getattr(info, "vmem_capacity_bytes", 0))
        if cap > 0:
            return cap
    except Exception:
        pass
    return 64 << 20  # conservative fallback (v7x per-TensorCore VMEM)


def _pick_block_rows(B, H, Lp, x_itemsize, out_itemsize, budget_bytes,
                     row_align, with_labels):
    """Largest batch tile that fits the VMEM budget, aligned, with >=2 steps."""
    # Streaming bytes per batch row (double-buffered input / output blocks).
    per_row = 2 * H * x_itemsize + 2 * Lp * out_itemsize
    if with_labels:
        per_row += 2 * Lp * 4          # f32 label block (double-buffered)
    # VMEM-resident: weight (H, Lp) + bias; loss partials are tiny.
    resident = Lp * H * x_itemsize + Lp * 4 + (2 * Lp * 4 if with_labels else 0)
    avail = budget_bytes - resident
    tm = avail // per_row if avail > 0 else row_align
    tm = max(row_align, (tm // row_align) * row_align)
    tm = min(tm, 1024)                 # per-step overhead vs. tile-size sweet spot
    # Keep the software pipeline alive: >= 2 grid steps whenever B allows it.
    if B >= 2 * row_align:
        tm = min(tm, _round_up(-(-B // 2), row_align))
    # Never tile beyond the (padded) batch.
    tm = min(tm, _round_up(B, row_align))
    return tm


def _head_logits_kernel(x_ref, w_ref, b_ref, y_ref):
    y = jnp.dot(x_ref[...], w_ref[...], preferred_element_type=jnp.float32)
    y_ref[...] = (y + b_ref[...]).astype(y_ref.dtype)


def _head_logits_loss_kernel(x_ref, w_ref, b_ref, lab_ref, y_ref, part_ref,
                             *, tm, b_real, mask_rows):
    y = jnp.dot(x_ref[...], w_ref[...], preferred_element_type=jnp.float32)
    y = y + b_ref[...]
    y_cast = y.astype(y_ref.dtype)
    y_ref[...] = y_cast
    # MSE diff from the materialized (cast) logits, matching PyTorch semantics.
    diff = y_cast.astype(jnp.float32) - lab_ref[...]
    if mask_rows:  # static flag: only emitted when B was padded to nb*tm
        rows = pl.program_id(0) * tm + lax.broadcasted_iota(
            jnp.int32, diff.shape, 0)
        diff = jnp.where(rows < b_real, diff, 0.0)
    # Lane-dense (1, 128) per-block partial sum; final reduce in the wrapper,
    # so the grid axis stays fully parallel (megacore on v7x).
    part_ref[...] = jnp.sum(diff * diff, axis=0, keepdims=True)


def simple_head_forward(hidden_state, weight, bias, labels=None,
                        block_rows=None, compute_dtype=None):
    """Pallas equivalent of SimpleHead.forward.

    hidden_state: (B, H)
    weight:       (num_labels, H)  (PyTorch nn.Linear layout)
    bias:         (num_labels,)
    labels:       optional (B, num_labels)
    Returns {'logits': (B, num_labels), 'loss': f32 scalar (0 if no labels)}.
    """
    B, H = hidden_state.shape
    L = weight.shape[0]
    out_dtype = hidden_state.dtype
    Lp = _round_up(L, _LANES)

    if compute_dtype is None:
        # Mem-bound kernel: bf16 inputs halve the HBM stream at production H.
        compute_dtype = jnp.bfloat16 if H >= 1024 else hidden_state.dtype
    compute_dtype = jnp.dtype(compute_dtype)
    x_itemsize = compute_dtype.itemsize
    out_itemsize = jnp.dtype(out_dtype).itemsize
    row_align = 16 if x_itemsize <= 2 else 8   # packed-sublane tiling for bf16

    phys = _physical_vmem_bytes()
    tile_budget = min(phys // 2, 32 << 20)                 # v7x-safe
    vmem_limit = int(max(32 << 20, min(phys * 3 // 4, 64 << 20)))

    with_labels = labels is not None
    tm = block_rows if block_rows is not None else _pick_block_rows(
        B, H, Lp, x_itemsize, out_itemsize, tile_budget, row_align, with_labels)
    nb = pl.cdiv(B, tm)
    B_pad = nb * tm
    assert tm == B_pad or tm % 8 == 0, "block_rows must be a multiple of 8"

    # ---- one-time wrapper-side layout prep ----
    x = hidden_state.astype(compute_dtype)
    if B_pad != B:
        x = jnp.pad(x, ((0, B_pad - B), (0, 0)))
    # Pre-transposed, lane-padded weight; padded columns are exactly zero.
    w_t = jnp.zeros((H, Lp), compute_dtype).at[:, :L].set(
        weight.T.astype(compute_dtype))
    b2 = jnp.zeros((1, Lp), jnp.float32).at[:, :L].set(bias.astype(jnp.float32))

    x_spec = pl.BlockSpec((tm, H), lambda i: (i, 0))
    w_spec = pl.BlockSpec((H, Lp), lambda i: (0, 0))   # VMEM-resident weight
    b_spec = pl.BlockSpec((1, Lp), lambda i: (0, 0))   # VMEM-resident bias
    y_spec = pl.BlockSpec((tm, Lp), lambda i: (i, 0))

    cparams = pltpu.CompilerParams(
        dimension_semantics=("parallel",), vmem_limit_bytes=vmem_limit)

    if not with_labels:
        cost = pl.CostEstimate(
            flops=2 * B_pad * H * Lp, transcendentals=0,
            bytes_accessed=(B_pad * H + H * Lp) * x_itemsize + Lp * 4
                           + B_pad * Lp * out_itemsize)
        logits = pl.pallas_call(
            _head_logits_kernel,
            grid=(nb,),
            in_specs=[x_spec, w_spec, b_spec],
            out_specs=y_spec,
            out_shape=jax.ShapeDtypeStruct((B_pad, Lp), out_dtype),
            compiler_params=cparams,
            cost_estimate=cost,
        )(x, w_t, b2)
        return {'logits': logits[:B, :L], 'loss': jnp.zeros((), jnp.float32)}

    lab = jnp.zeros((B_pad, Lp), jnp.float32).at[:B, :L].set(
        labels.astype(jnp.float32))
    lab_spec = pl.BlockSpec((tm, Lp), lambda i: (i, 0))
    part_spec = pl.BlockSpec((1, Lp), lambda i: (i, 0))

    kernel = functools.partial(_head_logits_loss_kernel, tm=tm, b_real=B,
                               mask_rows=(B_pad != B))
    cost = pl.CostEstimate(
        flops=2 * B_pad * H * Lp + 3 * B_pad * Lp, transcendentals=0,
        bytes_accessed=(B_pad * H + H * Lp) * x_itemsize + Lp * 4
                       + B_pad * Lp * (out_itemsize + 4) + nb * Lp * 4)

    logits, partials = pl.pallas_call(
        kernel,
        grid=(nb,),
        in_specs=[x_spec, w_spec, b_spec, lab_spec],
        out_specs=(y_spec, part_spec),
        out_shape=(jax.ShapeDtypeStruct((B_pad, Lp), out_dtype),
                   jax.ShapeDtypeStruct((nb, Lp), jnp.float32)),
        compiler_params=cparams,
        cost_estimate=cost,
    )(x, w_t, b2, lab)

    loss = jnp.sum(partials) * (1.0 / float(B * L))   # mean over B * num_labels
    return {'logits': logits[:B, :L], 'loss': loss}


if __name__ == "__main__":
    key = jax.random.PRNGKey(0)
    k_x, k_w, k_b, k_lab, k_x2, k_lab2, k_x3, k_lab3 = jax.random.split(key, 8)

    B, H, NUM_LABELS = 8, 32, 6  # small shapes consistent with SimpleHead

    hidden_state = jax.random.normal(k_x, (B, H), dtype=jnp.float32)
    bound = 1.0 / (H ** 0.5)
    weight = jax.random.uniform(k_w, (NUM_LABELS, H), jnp.float32, -bound, bound)
    bias = jax.random.uniform(k_b, (NUM_LABELS,), jnp.float32, -bound, bound)
    labels = jax.random.normal(k_lab, (B, NUM_LABELS), dtype=jnp.float32)

    ref_logits = hidden_state @ weight.T + bias
    ref_loss = jnp.mean((ref_logits - labels) ** 2)

    # --- single-block path (toy shape: one grid step) ---
    out_nolab = simple_head_forward(hidden_state, weight, bias)
    out = simple_head_forward(hidden_state, weight, bias, labels)
    jax.block_until_ready(out_nolab['logits'])
    jax.block_until_ready(out['logits'])
    jax.block_until_ready(out['loss'])
    assert jnp.allclose(out_nolab['logits'], ref_logits, atol=1e-5, rtol=1e-5)
    assert jnp.allclose(out['logits'], ref_logits, atol=1e-5, rtol=1e-5)
    assert jnp.allclose(out['loss'], ref_loss, atol=1e-5, rtol=1e-5)

    # --- batch-tiled path (grid > 1): resident weight + per-block loss partials
    B2 = 32
    hidden_state2 = jax.random.normal(k_x2, (B2, H), dtype=jnp.float32)
    labels2 = jax.random.normal(k_lab2, (B2, NUM_LABELS), dtype=jnp.float32)
    ref_logits2 = hidden_state2 @ weight.T + bias
    ref_loss2 = jnp.mean((ref_logits2 - labels2) ** 2)

    out2 = simple_head_forward(hidden_state2, weight, bias, labels2,
                               block_rows=8)          # grid = (4,)
    jax.block_until_ready(out2['loss'])
    assert jnp.allclose(out2['logits'], ref_logits2, atol=1e-5, rtol=1e-5)
    assert jnp.allclose(out2['loss'], ref_loss2, atol=1e-5, rtol=1e-5)

    out2b = simple_head_forward(hidden_state2, weight, bias, labels2)  # auto tm
    jax.block_until_ready(out2b['loss'])
    assert jnp.allclose(out2b['logits'], ref_logits2, atol=1e-5, rtol=1e-5)
    assert jnp.allclose(out2b['loss'], ref_loss2, atol=1e-5, rtol=1e-5)

    # --- ragged batch (B not a multiple of block_rows): padded + masked rows ---
    B3 = 20
    hidden_state3 = jax.random.normal(k_x3, (B3, H), dtype=jnp.float32)
    labels3 = jax.random.normal(k_lab3, (B3, NUM_LABELS), dtype=jnp.float32)
    out3 = simple_head_forward(hidden_state3, weight, bias, labels3,
                               block_rows=8)          # grid = (3,), B padded to 24
    jax.block_until_ready(out3['loss'])
    ref_logits3 = hidden_state3 @ weight.T + bias
    ref_loss3 = jnp.mean((ref_logits3 - labels3) ** 2)
    assert jnp.allclose(out3['logits'], ref_logits3, atol=1e-5, rtol=1e-5)
    assert jnp.allclose(out3['loss'], ref_loss3, atol=1e-5, rtol=1e-5)

    # --- bf16 compute path (halves the hidden_state HBM stream) ---
    out_bf16 = simple_head_forward(hidden_state2, weight, bias, labels2,
                                   compute_dtype=jnp.bfloat16)
    jax.block_until_ready(out_bf16['loss'])
    assert jnp.allclose(out_bf16['logits'], ref_logits2, atol=3e-2, rtol=3e-2)
    assert jnp.allclose(out_bf16['loss'], ref_loss2, atol=3e-2, rtol=3e-2)

    print("KERNEL_OK")
</pallas_src>

<mosaic_0001>
module attributes {stable_mosaic.version = 11 : i64} {
  func.func @_head_logits_kernel(%arg0: i32, %arg1: memref<8x32xf32, #tpu.memory_space<vmem>>, %arg2: memref<32x128xf32, #tpu.memory_space<vmem>>, %arg3: memref<1x128xf32, #tpu.memory_space<vmem>>, %arg4: memref<8x128xf32, #tpu.memory_space<vmem>>) attributes {dimension_semantics = [#tpu.dimension_semantics<parallel>], iteration_bounds = array<i64: 1>, scalar_prefetch = 0 : i64, scratch_operands = 0 : i64, tpu.core_type = #tpu.core_type<tc>, window_params = [{transform_indices = @transform_0, window_bounds = array<i64: 8, 32>}, {pipeline_mode = #tpu.pipeline_mode<synchronous>, transform_indices = @transform_1, window_bounds = array<i64: 32, 128>}, {pipeline_mode = #tpu.pipeline_mode<synchronous>, transform_indices = @transform_2, window_bounds = array<i64: 1, 128>}, {transform_indices = @transform_3, window_bounds = array<i64: 8, 128>}]} {
    %c0 = arith.constant 0 : index
    %c0_0 = arith.constant 0 : index
    %0 = vector.load %arg1[%c0, %c0_0] : memref<8x32xf32, #tpu.memory_space<vmem>>, vector<8x32xf32>
    %c0_1 = arith.constant 0 : index
    %c0_2 = arith.constant 0 : index
    %1 = vector.load %arg2[%c0_1, %c0_2] : memref<32x128xf32, #tpu.memory_space<vmem>>, vector<32x128xf32>
    %cst = arith.constant dense<0.000000e+00> : vector<8x128xf32>
    %2 = tpu.matmul %0, %1, %cst {dimension_numbers = #tpu.dot_dimension_numbers<[1], [0], [0], [1], [0, 0, 1, 1], [], []>} : vector<8x32xf32>, vector<32x128xf32>, vector<8x128xf32> -> vector<8x128xf32>
    %c0_3 = arith.constant 0 : index
    %c0_4 = arith.constant 0 : index
    %3 = vector.load %arg3[%c0_3, %c0_4] : memref<1x128xf32, #tpu.memory_space<vmem>>, vector<1x128xf32>
    %4 = vector.broadcast %3 : vector<1x128xf32> to vector<8x128xf32>
    %5 = arith.addf %2, %4 : vector<8x128xf32>
    %c0_5 = arith.constant 0 : index
    %c0_6 = arith.constant 0 : index
    %6 = vector.load %arg4[%c0_5, %c0_6] : memref<8x128xf32, #tpu.memory_space<vmem>>, vector<8x128xf32>
    tpu.vector_store %arg4[%c0_5, %c0_6], %5 {strides = array<i32>} : memref<8x128xf32, #tpu.memory_space<vmem>>, vector<8x128xf32>,
    return
  }
  func.func @transform_0(%arg0: i32) -> (i32, i32) {
    %c0_i32 = arith.constant 0 : i32
    %c0_i32_0 = arith.constant 0 : i32
    return %arg0, %c0_i32 : i32, i32
  }
  func.func @transform_1(%arg0: i32) -> (i32, i32) {
    %c0_i32 = arith.constant 0 : i32
    %c0_i32_0 = arith.constant 0 : i32
    %c0_i32_1 = arith.constant 0 : i32
    return %c0_i32, %c0_i32_0 : i32, i32
  }
  func.func @transform_2(%arg0: i32) -> (i32, i32) {
    %c0_i32 = arith.constant 0 : i32
    %c0_i32_0 = arith.constant 0 : i32
    %c0_i32_1 = arith.constant 0 : i32
    return %c0_i32, %c0_i32_0 : i32, i32
  }
  func.func @transform_3(%arg0: i32) -> (i32, i32) {
    %c0_i32 = arith.constant 0 : i32
    %c0_i32_0 = arith.constant 0 : i32
    return %arg0, %c0_i32 : i32, i32
  }
}

</mosaic_0001>

<llo_original>
// kernel: tpu_custom_call.1
$region0: #{tpu_custom_call.1}
  #allocation0 [shape = 'u32[]', space=smem, size = 0x4, offset = 0x4, fixed_abs, tag = 'smem constant byte address 0x4 - core index']
  #allocation1 [shape = 'u32[144,128]{1,0:T(1,128)}', space=vmem, size = 0x12000, scoped, tag = 'internal scratch']
  %s0 = inlined_call_operand.hbm [shape: f32[8,32], index: 0, kind: input, shape index: {}]
  %s1 = inlined_call_operand.hbm [shape: f32[32,128], index: 1, kind: input, shape index: {}]
  %s2 = inlined_call_operand.vmem [shape: f32[1,128], index: 2, kind: input, shape index: {}]
  %s3 = inlined_call_operand.hbm [shape: f32[8,128], index: 3, kind: output, shape index: {}]
  %s4 = sld [smem:[#allocation0]]
  $region30: #{tpu_custom_call.1} parent=0
    _
  %s6 = ssub.s32 1, %s4
  %s7 = scalar_select 0, %s6, %s4
  $region1: #{tpu_custom_call.1} parent=0
    #allocation2 [shape = 'u8[4096]{0}', space=vmem, size = 0x1000, scoped, tag = 'input window, operand 0, single buffered']
    #allocation3 [shape = 's32[1]{0}', space=sflag, size = 0x4, scoped, tag = 'scoped memory for tpu_custom_call.1']
    #allocation4 [shape = 's32[1]{0}', space=sflag, size = 0x4, scoped, tag = 'scoped memory for tpu_custom_call.1']
    #allocation5 [shape = 'u8[16384]{0}', space=vmem, size = 0x4000, scoped, tag = 'input window, operand 1, single buffered']
    #allocation6 [shape = 's32[1]{0}', space=sflag, size = 0x4, scoped, tag = 'scoped memory for tpu_custom_call.1']
    #allocation7 [shape = 'u8[4096]{0}', space=vmem, size = 0x1000, scoped, tag = 'output window, operand 0, single buffered']
    %8 = vsyncpa [#allocation3], 0
    %9 = vsyncpa [#allocation6], 0
    %10 = vsyncpa [#allocation4], 0
    // Predicated region
    $region2: #{tpu_custom_call.1} parent=1 // pred_check
      _
    $region3: #{tpu_custom_call.1} parent=1 // pred_check_branch
      %12 = sbr.rel (0) target = $region5
    $region4: #{tpu_custom_call.1} parent=1 // pred_region
      %s14 = ssub.s32 128, 128
      %15 = vsyncadd [#allocation3], %s14
      %s17 = sshll.u32 [#allocation2], 4
      %s18 = int_to_ptr.vmem [resolvable:$true] %s17
      %20 = dma.hbm_to_vmem [thread:$0]  %s0, 128, %s18, [#allocation3]
    $region5: #{tpu_custom_call.1} parent=1 // pred_fallthru
      _
    // Predicated region
    $region6: #{tpu_custom_call.1} parent=1 // pred_check
      _
    $region7: #{tpu_custom_call.1} parent=1 // pred_check_branch
      %22 = sbr.rel (0) target = $region9
    $region8: #{tpu_custom_call.1} parent=1 // pred_region
      %s24 = ssub.s32 512, 512
      %25 = vsyncadd [#allocation6], %s24
      %s26 = sshll.u32 [#allocation5], 4
      %s27 = int_to_ptr.vmem [resolvable:$true] %s26
      %32 = dma.hbm_to_vmem [thread:$0]  %s1, 512, %s27, [#allocation6], 128, 128, 8
    $region9: #{tpu_custom_call.1} parent=1 // pred_fallthru
      _
    // Predicated region
    $region10: #{tpu_custom_call.1} parent=1 // pred_check
      _
    $region11: #{tpu_custom_call.1} parent=1 // pred_check_branch
      %34 = sbr.rel (0) target = $region13
    $region12: #{tpu_custom_call.1} parent=1 // pred_region
      _
    $region13: #{tpu_custom_call.1} parent=1 // pred_fallthru
      _
    // Predicated region
    $region14: #{tpu_custom_call.1} parent=1 // pred_check
      _
    $region15: #{tpu_custom_call.1} parent=1 // pred_check_branch
      %36 = sbr.rel (0) target = $region17
    $region16: #{tpu_custom_call.1} parent=1 // pred_region
      %37 = dma.done [#allocation3], 128
    $region17: #{tpu_custom_call.1} parent=1 // pred_fallthru
      _
    // Predicated region
    $region18: #{tpu_custom_call.1} parent=1 // pred_check
      _
    $region19: #{tpu_custom_call.1} parent=1 // pred_check_branch
      %39 = sbr.rel (0) target = $region21
    $region20: #{tpu_custom_call.1} parent=1 // pred_region
      %40 = dma.done [#allocation6], 512
    $region21: #{tpu_custom_call.1} parent=1 // pred_fallthru
      _
    %v41 = vld [vmem:[#allocation2] sm:$0xff]
    %v42 = vld [vmem:[#allocation5] sm:$0xff]
    %v43 = vld [vmem:[#allocation5 + $0x8] sm:$0xff]
    %v44 = vld [vmem:[#allocation5 + $0x10] sm:$0xff]
    %v45 = vld [vmem:[#allocation5 + $0x18] sm:$0xff]
    %v46 = vld [vmem:[%s2] sm:$0x1]
    %v48 = vlaneseq
    %v49 = vshrl.u32 %v48, 7
    %v50 = vsub.s32 0, %v49
    %v51 = vrot.slane %v46, %v50
    %vm53 = vcmask 261120
    %v55 = vsel %vm53, %v41, 0
    %57 = vmatprep.subr.mxu0 0.0
    %58 = vmatpush1.msra.mxu0 %v42
    %59 = vmatprep.subr.mxu0 0.0
    %60 = vmatpush1.msra.mxu0 %v43
    %61 = vmatprep.subr.mxu0 0.0
    %62 = vmatpush1.msra.mxu0 %v44
    %63 = vmatprep.subr.mxu0 0.0
    %64 = vmatpush1.msra.mxu0 %v45
    %65 = vmatprep.subr.mxu0 0.0
    %66 = vmatpush1.msra.mxu0 0.0
    %67 = vmatprep.subr.mxu0 0.0
    %68 = vmatpush1.msra.mxu0 0.0
    %69 = vmatprep.subr.mxu0 0.0
    %70 = vmatpush1.msra.mxu0 0.0
    %71 = vmatprep.subr.mxu0 0.0
    %72 = vmatpush1.msra.mxu0 0.0
    %73 = vmatprep.subr.mxu0 0.0
    %74 = vmatpush1.msra.mxu0 0.0
    %75 = vmatprep.subr.mxu0 0.0
    %76 = vmatpush1.msra.mxu0 0.0
    %77 = vmatprep.subr.mxu0 0.0
    %78 = vmatpush1.msra.mxu0 0.0
    %79 = vmatprep.subr.mxu0 0.0
    %80 = vmatpush1.msra.mxu0 0.0
    %81 = vmatprep.subr.mxu0 0.0
    %82 = vmatpush1.msra.mxu0 0.0
    %83 = vmatprep.subr.mxu0 0.0
    %84 = vmatpush1.msra.mxu0 0.0
    %85 = vmatprep.subr.mxu0 0.0
    %86 = vmatpush1.msra.mxu0 0.0
    %87 = vmatprep.subr.mxu0 0.0
    %88 = vmatpush1.msra.mxu0 0.0
    %89 = vmatprep.subr.mxu0 0.0
    %90 = vmatpush1.msra.mxu0 0.0
    %91 = vmatprep.subr.mxu0 0.0
    %92 = vmatpush1.msra.mxu0 0.0
    %93 = vmatprep.subr.mxu0 0.0
    %94 = vmatpush1.msra.mxu0 0.0
    %95 = vmatprep.subr.mxu0 0.0
    %96 = vmatpush1.msra.mxu0 0.0
    %97 = vmatprep.subr.mxu0 0.0
    %98 = vmatpush1.msra.mxu0 0.0
    %99 = vmatprep.subr.mxu0 0.0
    %100 = vmatpush1.msra.mxu0 0.0
    %101 = vmatprep.subr.mxu0 0.0
    %102 = vmatpush1.msra.mxu0 0.0
    %103 = vmatprep.subr.mxu0 0.0
    %104 = vmatpush1.msra.mxu0 0.0
    %105 = vmatprep.subr.mxu0 0.0
    %106 = vmatpush1.msra.mxu0 0.0
    %107 = vmatprep.subr.mxu0 0.0
    %108 = vmatpush1.msra.mxu0 0.0
    %109 = vmatprep.subr.mxu0 0.0
    %110 = vmatpush1.msra.mxu0 0.0
    %111 = vmatprep.subr.mxu0 0.0
    %112 = vmatpush1.msra.mxu0 0.0
    %113 = vmatprep.subr.mxu0 0.0
    %114 = vmatpush1.msra.mxu0 0.0
    %115 = vmatprep.subr.mxu0 0.0
    %116 = vmatpush1.msra.mxu0 0.0
    %117 = vmatprep.subr.mxu0 0.0
    %118 = vmatpush1.msra.mxu0 0.0
    %119 = vmatprep.subr.mxu0 0.0
    %120 = vmatpush1.msra.mxu0 0.0
    %121 = vmatprep.mubr.f32.mxu0 0.0
    %122 = vmatmul.mubr.f32.gmra.mrb[0].mxu0 %v55
    %v123 = vpop.f32.mrb[0].mxu0
    %v124 = vadd.f32 %v51, %v123
    %v125 = vpop.f32.mrb[0].mxu0
    %126 = vdwg.mxu0
    %127 = vst [vmem:[#allocation7] sm:$0xff] %v124
    // Predicated region
    $region22: #{tpu_custom_call.1} parent=1 // pred_check
      _
    $region23: #{tpu_custom_call.1} parent=1 // pred_check_branch
      %129 = sbr.rel (0) target = $region25
    $region24: #{tpu_custom_call.1} parent=1 // pred_region
      %s131 = ssub.s32 128, 128
      %132 = vsyncadd [#allocation4], %s131
      %s134 = sshll.u32 [#allocation7], 4
      %s135 = int_to_ptr.vmem [resolvable:$true] %s134
      %137 = dma.vmem_to_hbm [thread:$0]  %s135, 128, %s3, [#allocation4]
    $region25: #{tpu_custom_call.1} parent=1 // pred_fallthru
      _
    // Predicated region
    $region26: #{tpu_custom_call.1} parent=1 // pred_check
      _
    $region27: #{tpu_custom_call.1} parent=1 // pred_check_branch
      %139 = sbr.rel (0) target = $region29
    $region28: #{tpu_custom_call.1} parent=1 // pred_region
      %140 = dma.done [#allocation4], 128
    $region29: #{tpu_custom_call.1} parent=1 // pred_fallthru
      _
    %141 = vsyncpa [#allocation3], 1
    %142 = vsyncpa [#allocation6], 1
    %143 = vsyncpa [#allocation4], 1

</llo_original>
